<compile_context>
chip_gen: v7x
topology: tpu7x:2x2x1
jax: 0.10.0
libtpu: 0.0.40
codegen_flags: <defaults>
</compile_context>

<pallas_src>
import jax
import jax.numpy as jnp
from jax.experimental import pallas as pl
from jax.experimental.pallas import tpu as pltpu


def conv_bn_kernel(x_ref, w_ref, scale_ref, bias_ref, o_ref):
    """Nb images per step: 3 accumulated MXU GEMMs (one per kh tap) + f32 epilogue.

    x_ref:     (Nb, Hp2, P_pad)   bf16  padded rows, flattened (W+2+ew)*Cin
    w_ref:     (3,  P_pad, Q_pad) bf16  banded (block-Toeplitz) raw conv weights
    scale_ref: (1, Q_pad)         f32   BN scale gamma/sqrt(var+eps), tiled over W
    bias_ref:  (1, Q_pad)         f32   conv_bias*scale + (beta - mean*scale), tiled
    o_ref:     (Nb, H, Q_pad)     f32
    """
    nb, h, q = o_ref.shape
    p_pad = x_ref.shape[-1]
    m = nb * h
    x = x_ref[...]
    # kh = 0, 1, 2 row-shifted views -> three accumulated K = P_pad dots
    # (no (M, 3*P_pad) concat temp; f32 accumulation on the MXU).
    acc = jnp.dot(x[:, 0:h, :].reshape(m, p_pad), w_ref[0],
                  preferred_element_type=jnp.float32)
    acc = acc + jnp.dot(x[:, 1:h + 1, :].reshape(m, p_pad), w_ref[1],
                        preferred_element_type=jnp.float32)
    acc = acc + jnp.dot(x[:, 2:h + 2, :].reshape(m, p_pad), w_ref[2],
                        preferred_element_type=jnp.float32)
    out = acc * scale_ref[...] + bias_ref[...]          # BN affine in f32 epilogue
    o_ref[...] = out.reshape(nb, h, q).astype(o_ref.dtype)


def conv_bn(x_nchw, w_oihw, bias, gamma, beta, running_mean, running_var,
            *, stride=1, padding=1, dilation=1, groups=1, eps=1e-5):
    """Forward of Conv(..., k=3, s=1, p=1, bias=True, bn=True) in eval mode."""
    N, Cin, H, W = x_nchw.shape
    Cout, Cin_w, KH, KW = w_oihw.shape
    assert Cin == Cin_w and (KH, KW) == (3, 3)
    assert stride == 1 and padding == 1 and dilation == 1 and groups == 1, (
        "banded-GEMM path implements only k=3, s=1, p=1, d=1, groups=1")
    f32, bf16 = jnp.float32, jnp.bfloat16

    # ---- BatchNorm (eval) as a per-Cout affine, applied in the f32 epilogue -
    scale = gamma.astype(f32) / jnp.sqrt(running_var.astype(f32) + eps)   # (Cout,)
    bias_fold = bias.astype(f32) * scale + (beta.astype(f32)
                                            - running_mean.astype(f32) * scale)

    # ---- banded (block-Toeplitz) raw conv weights ---------------------------
    w_k = jnp.transpose(w_oihw.astype(f32), (2, 3, 1, 0))       # (KH,KW,Cin,Cout)
    Wp = W + 2
    P = Wp * Cin                      # flattened padded input row length
    Q = W * Cout                      # flattened output row length
    P_pad = ((P + 127) // 128) * 128
    Q_pad = ((Q + 127) // 128) * 128  # lane-dense, unmasked stores
    Hp2 = ((H + 2 + 15) // 16) * 16   # bf16 sublane tile alignment

    band_bytes = KH * P_pad * Q_pad * 2
    # TODO(synk): beyond this gate the banded slab blows VMEM (v7x: 64 MiB) and
    #             wastes MXU K-passes; use a halo row-tile + K=9*Cin im2col GEMM.
    assert band_bytes <= 8 * 1024 * 1024, "banded-Toeplitz weight slab too large"

    bands = []
    for kh in range(KH):
        b_kh = jnp.zeros((Wp, Cin, W, Cout), f32)
        for kw in range(KW):
            sel = jnp.eye(Wp, W, k=-kw, dtype=f32)              # [a,x]=1 iff a=x+kw
            b_kh = b_kh + jnp.einsum('ax,io->aixo', sel, w_k[kh, kw])
        bands.append(b_kh.reshape(P, Q))
    B = jnp.stack(bands, axis=0)                                # (KH, P, Q)
    B = jnp.pad(B, ((0, 0), (0, P_pad - P), (0, Q_pad - Q)))
    B = B.astype(bf16)                                          # (KH, P_pad, Q_pad)

    def tile_q(v):                                              # (Cout,) -> (1,Q_pad)
        v = jnp.tile(v.astype(f32), (W,))
        return jnp.pad(v, (0, Q_pad - Q)).reshape(1, Q_pad)
    scale_q = tile_q(scale)
    bias_q = tile_q(bias_fold)

    # ---- input: cast to bf16 FIRST, then a single fused spatial/lane/row pad
    x_nhwc = jnp.transpose(x_nchw.astype(bf16), (0, 2, 3, 1))   # (N,H,W,Cin)
    lane_extra = P_pad - P
    row_extra = Hp2 - (H + 2)
    if lane_extra % Cin == 0:
        x_sp = jnp.pad(x_nhwc, ((0, 0), (1, 1 + row_extra),
                                (1, 1 + lane_extra // Cin), (0, 0)))
        x_rows = x_sp.reshape(N, Hp2, P_pad)
    else:
        x_sp = jnp.pad(x_nhwc, ((0, 0), (1, 1 + row_extra), (1, 1), (0, 0)))
        x_rows = jnp.pad(x_sp.reshape(N, Hp2, P), ((0, 0), (0, 0), (0, lane_extra)))

    # ---- grid: 2 even steps when N is even (both v7x TCs), else 1 ----------
    G = 2 if N % 2 == 0 else 1
    Nb = N // G

    # VMEM budget from actual buffer footprint (+ headroom), not hard-coded.
    x_blk = Nb * Hp2 * P_pad * 2 * 2                 # bf16, double-buffered
    w_blk = KH * P_pad * Q_pad * 2 * 1               # bf16, Buffered(1)
    sb_blk = 2 * Q_pad * 4                           # scale + bias, Buffered(1)
    o_blk = Nb * H * Q_pad * 4 * 2                   # f32, double-buffered
    tmp = Nb * H * (3 * P_pad * 2 + 2 * Q_pad * 4)   # slice/accumulator headroom
    vmem_limit = int(max(16 * 1024 * 1024,
                         2 * (x_blk + w_blk + sb_blk + o_blk + tmp)))

    out_flat = pl.pallas_call(
        conv_bn_kernel,
        out_shape=jax.ShapeDtypeStruct((N, H, Q_pad), f32),
        grid_spec=pltpu.PrefetchScalarGridSpec(
            num_scalar_prefetch=0,
            grid=(G,),
            in_specs=[
                pl.BlockSpec((Nb, Hp2, P_pad), lambda g: (g, 0, 0)),
                # constant index_maps + single buffering -> one resident VMEM copy
                pl.BlockSpec((KH, P_pad, Q_pad), lambda g: (0, 0, 0),
                             pipeline_mode=pl.Buffered(1)),
                pl.BlockSpec((1, Q_pad), lambda g: (0, 0),
                             pipeline_mode=pl.Buffered(1)),
                pl.BlockSpec((1, Q_pad), lambda g: (0, 0),
                             pipeline_mode=pl.Buffered(1)),
            ],
            out_specs=pl.BlockSpec((Nb, H, Q_pad), lambda g: (g, 0, 0)),
        ),
        compiler_params=pltpu.CompilerParams(
            dimension_semantics=("parallel",),       # even grid -> both v7x TCs
            vmem_limit_bytes=vmem_limit),
    )(x_rows, B, scale_q, bias_q)

    out_nhwc = out_flat[..., :Q].reshape(N, H, W, Cout)
    return jnp.transpose(out_nhwc, (0, 3, 1, 2))                 # back to NCHW


if __name__ == "__main__":
    key = jax.random.PRNGKey(0)
    k1, k2, k3, k4, k5, k6, k7 = jax.random.split(key, 7)

    N, Cin, H, W = 2, 4, 16, 16
    Cout = 8
    eps = 1e-5

    x = jax.random.normal(k1, (N, Cin, H, W), jnp.float32)
    w = jax.random.normal(k2, (Cout, Cin, 3, 3), jnp.float32) * 0.1
    b = jax.random.normal(k3, (Cout,), jnp.float32) * 0.1
    gamma = 1.0 + 0.1 * jax.random.normal(k4, (Cout,), jnp.float32)
    beta = 0.1 * jax.random.normal(k5, (Cout,), jnp.float32)
    running_mean = 0.1 * jax.random.normal(k6, (Cout,), jnp.float32)
    running_var = jnp.abs(1.0 + 0.1 * jax.random.normal(k7, (Cout,), jnp.float32))

    out = jax.block_until_ready(
        conv_bn(x, w, b, gamma, beta, running_mean, running_var, eps=eps))

    # pure-JAX f32 reference (conv + eval-mode BN) for sanity
    ref = jax.lax.conv_general_dilated(
        x, w, window_strides=(1, 1), padding=((1, 1), (1, 1)),
        dimension_numbers=("NCHW", "OIHW", "NCHW"))
    ref = ref + b.reshape(1, Cout, 1, 1)
    ref = (ref - running_mean.reshape(1, Cout, 1, 1)) / jnp.sqrt(
        running_var.reshape(1, Cout, 1, 1) + eps)
    ref = ref * gamma.reshape(1, Cout, 1, 1) + beta.reshape(1, Cout, 1, 1)

    assert out.shape == (N, Cout, H, W)
    # bf16 activations/weights with f32 accumulation vs f32 reference
    assert jnp.allclose(out, ref, atol=5e-2, rtol=5e-2), "mismatch vs reference"
    print("KERNEL_OK")
</pallas_src>

<mosaic_0001>
module attributes {stable_mosaic.version = 11 : i64} {
  func.func @conv_bn_kernel(%arg0: i32, %arg1: memref<1x32x128xbf16, #tpu.memory_space<vmem>>, %arg2: memref<3x128x128xbf16, #tpu.memory_space<vmem>>, %arg3: memref<1x128xf32, #tpu.memory_space<vmem>>, %arg4: memref<1x128xf32, #tpu.memory_space<vmem>>, %arg5: memref<1x16x128xf32, #tpu.memory_space<vmem>>) attributes {dimension_semantics = [#tpu.dimension_semantics<parallel>], iteration_bounds = array<i64: 2>, scalar_prefetch = 0 : i64, scratch_operands = 0 : i64, tpu.core_type = #tpu.core_type<tc>, window_params = [{transform_indices = @transform_0, window_bounds = array<i64: 1, 32, 128>}, {pipeline_mode = #tpu.pipeline_mode<synchronous>, transform_indices = @transform_1, window_bounds = array<i64: 3, 128, 128>}, {pipeline_mode = #tpu.pipeline_mode<synchronous>, transform_indices = @transform_2, window_bounds = array<i64: 1, 128>}, {pipeline_mode = #tpu.pipeline_mode<synchronous>, transform_indices = @transform_3, window_bounds = array<i64: 1, 128>}, {transform_indices = @transform_4, window_bounds = array<i64: 1, 16, 128>}]} {
    %c0 = arith.constant 0 : index
    %c0_0 = arith.constant 0 : index
    %c0_1 = arith.constant 0 : index
    %0 = vector.load %arg1[%c0, %c0_0, %c0_1] : memref<1x32x128xbf16, #tpu.memory_space<vmem>>, vector<1x32x128xbf16>
    %1 = vector.extract_strided_slice %0 {offsets = [0, 0, 0], sizes = [1, 16, 128], strides = [1, 1, 1]} : vector<1x32x128xbf16> to vector<1x16x128xbf16>
    %2 = vector.shape_cast %1 : vector<1x16x128xbf16> to vector<16x128xbf16>
    %c0_2 = arith.constant 0 : index
    %c0_3 = arith.constant 0 : index
    %c0_4 = arith.constant 0 : index
    %3 = vector.load %arg2[%c0_2, %c0_3, %c0_4] : memref<3x128x128xbf16, #tpu.memory_space<vmem>>, vector<1x128x128xbf16>
    %4 = vector.shape_cast %3 : vector<1x128x128xbf16> to vector<128x128xbf16>
    %cst = arith.constant dense<0.000000e+00> : vector<16x128xf32>
    %5 = tpu.matmul %2, %4, %cst {dimension_numbers = #tpu.dot_dimension_numbers<[1], [0], [0], [1], [0, 0, 1, 1], [], []>} : vector<16x128xbf16>, vector<128x128xbf16>, vector<16x128xf32> -> vector<16x128xf32>
    %6 = vector.extract_strided_slice %0 {offsets = [0, 1, 0], sizes = [1, 16, 128], strides = [1, 1, 1]} : vector<1x32x128xbf16> to vector<1x16x128xbf16>
    %7 = vector.shape_cast %6 : vector<1x16x128xbf16> to vector<16x128xbf16>
    %c1 = arith.constant 1 : index
    %c0_5 = arith.constant 0 : index
    %c0_6 = arith.constant 0 : index
    %8 = vector.load %arg2[%c1, %c0_5, %c0_6] : memref<3x128x128xbf16, #tpu.memory_space<vmem>>, vector<1x128x128xbf16>
    %9 = vector.shape_cast %8 : vector<1x128x128xbf16> to vector<128x128xbf16>
    %cst_7 = arith.constant dense<0.000000e+00> : vector<16x128xf32>
    %10 = tpu.matmul %7, %9, %cst_7 {dimension_numbers = #tpu.dot_dimension_numbers<[1], [0], [0], [1], [0, 0, 1, 1], [], []>} : vector<16x128xbf16>, vector<128x128xbf16>, vector<16x128xf32> -> vector<16x128xf32>
    %11 = arith.addf %5, %10 : vector<16x128xf32>
    %12 = vector.extract_strided_slice %0 {offsets = [0, 2, 0], sizes = [1, 16, 128], strides = [1, 1, 1]} : vector<1x32x128xbf16> to vector<1x16x128xbf16>
    %13 = vector.shape_cast %12 : vector<1x16x128xbf16> to vector<16x128xbf16>
    %c2 = arith.constant 2 : index
    %c0_8 = arith.constant 0 : index
    %c0_9 = arith.constant 0 : index
    %14 = vector.load %arg2[%c2, %c0_8, %c0_9] : memref<3x128x128xbf16, #tpu.memory_space<vmem>>, vector<1x128x128xbf16>
    %15 = vector.shape_cast %14 : vector<1x128x128xbf16> to vector<128x128xbf16>
    %cst_10 = arith.constant dense<0.000000e+00> : vector<16x128xf32>
    %16 = tpu.matmul %13, %15, %cst_10 {dimension_numbers = #tpu.dot_dimension_numbers<[1], [0], [0], [1], [0, 0, 1, 1], [], []>} : vector<16x128xbf16>, vector<128x128xbf16>, vector<16x128xf32> -> vector<16x128xf32>
    %17 = arith.addf %11, %16 : vector<16x128xf32>
    %c0_11 = arith.constant 0 : index
    %c0_12 = arith.constant 0 : index
    %18 = vector.load %arg3[%c0_11, %c0_12] : memref<1x128xf32, #tpu.memory_space<vmem>>, vector<1x128xf32>
    %19 = vector.broadcast %18 : vector<1x128xf32> to vector<16x128xf32>
    %20 = arith.mulf %17, %19 : vector<16x128xf32>
    %c0_13 = arith.constant 0 : index
    %c0_14 = arith.constant 0 : index
    %21 = vector.load %arg4[%c0_13, %c0_14] : memref<1x128xf32, #tpu.memory_space<vmem>>, vector<1x128xf32>
    %22 = vector.broadcast %21 : vector<1x128xf32> to vector<16x128xf32>
    %23 = arith.addf %20, %22 : vector<16x128xf32>
    %24 = vector.shape_cast %23 : vector<16x128xf32> to vector<1x16x128xf32>
    %c0_15 = arith.constant 0 : index
    %c0_16 = arith.constant 0 : index
    %c0_17 = arith.constant 0 : index
    %25 = vector.load %arg5[%c0_15, %c0_16, %c0_17] : memref<1x16x128xf32, #tpu.memory_space<vmem>>, vector<1x16x128xf32>
    tpu.vector_store %arg5[%c0_15, %c0_16, %c0_17], %24 {strides = array<i32>} : memref<1x16x128xf32, #tpu.memory_space<vmem>>, vector<1x16x128xf32>,
    return
  }
  func.func @transform_0(%arg0: i32) -> (i32, i32, i32) {
    %c0_i32 = arith.constant 0 : i32
    %c0_i32_0 = arith.constant 0 : i32
    %c0_i32_1 = arith.constant 0 : i32
    return %arg0, %c0_i32, %c0_i32_0 : i32, i32, i32
  }
  func.func @transform_1(%arg0: i32) -> (i32, i32, i32) {
    %c0_i32 = arith.constant 0 : i32
    %c0_i32_0 = arith.constant 0 : i32
    %c0_i32_1 = arith.constant 0 : i32
    %c0_i32_2 = arith.constant 0 : i32
    return %c0_i32, %c0_i32_0, %c0_i32_1 : i32, i32, i32
  }
  func.func @transform_2(%arg0: i32) -> (i32, i32) {
    %c0_i32 = arith.constant 0 : i32
    %c0_i32_0 = arith.constant 0 : i32
    %c0_i32_1 = arith.constant 0 : i32
    return %c0_i32, %c0_i32_0 : i32, i32
  }
  func.func @transform_3(%arg0: i32) -> (i32, i32) {
    %c0_i32 = arith.constant 0 : i32
    %c0_i32_0 = arith.constant 0 : i32
    %c0_i32_1 = arith.constant 0 : i32
    return %c0_i32, %c0_i32_0 : i32, i32
  }
  func.func @transform_4(%arg0: i32) -> (i32, i32, i32) {
    %c0_i32 = arith.constant 0 : i32
    %c0_i32_0 = arith.constant 0 : i32
    %c0_i32_1 = arith.constant 0 : i32
    return %arg0, %c0_i32, %c0_i32_0 : i32, i32, i32
  }
}

</mosaic_0001>

<llo_original>
// kernel: tpu_custom_call.1
$region0: #{tpu_custom_call.1}
  #allocation0 [shape = 'u32[]', space=smem, size = 0x4, offset = 0x4, fixed_abs, tag = 'smem constant byte address 0x4 - core index']
  #allocation1 [shape = 'u32[144,128]{1,0:T(1,128)}', space=vmem, size = 0x12000, scoped, tag = 'internal scratch']
  %s0 = inlined_call_operand.hbm [shape: bf16[2,32,128], index: 0, kind: input, shape index: {}]
  %s1 = inlined_call_operand.hbm [shape: bf16[3,128,128], index: 1, kind: input, shape index: {}]
  %s2 = inlined_call_operand.vmem [shape: f32[1,128], index: 2, kind: input, shape index: {}]
  %s3 = inlined_call_operand.vmem [shape: f32[1,128], index: 3, kind: input, shape index: {}]
  %s4 = inlined_call_operand.hbm [shape: f32[2,16,128], index: 4, kind: output, shape index: {}]
  %s5 = sld [smem:[#allocation0]]
  $region57: #{tpu_custom_call.1} parent=0
    _
  %s7 = ssub.s32 1, %s5
  %s8 = scalar_select 0, %s7, %s5
  $region1: #{tpu_custom_call.1} parent=0
    #allocation2 [shape = 'u8[16384]{0}', space=vmem, size = 0x4000, scoped, tag = 'input window, operand 0']
    #allocation3 [shape = 's32[2]{0}', space=sflag, size = 0x8, scoped, tag = 'scoped memory for tpu_custom_call.1']
    #allocation4 [shape = 's32[2]{0}', space=sflag, size = 0x8, scoped, tag = 'scoped memory for tpu_custom_call.1']
    #allocation5 [shape = 'u8[98304]{0}', space=vmem, size = 0x18000, scoped, tag = 'input window, operand 1, single buffered']
    #allocation6 [shape = 's32[1]{0}', space=sflag, size = 0x4, scoped, tag = 'scoped memory for tpu_custom_call.1']
    #allocation7 [shape = 'u8[16384]{0}', space=vmem, size = 0x4000, scoped, tag = 'output window, operand 0']
    %9 = vsyncpa [#allocation3], 0
    %s10 = scalar_lea.sflag [#allocation3], 1
    %11 = vsyncpa %s10, 0
    %12 = vsyncpa [#allocation6], 0
    %13 = vsyncpa [#allocation4], 0
    %s14 = scalar_lea.sflag [#allocation4], 1
    %15 = vsyncpa %s14, 0
    loop: start=0, step=1, limit=4
    $region2: #{tpu_custom_call.1} parent=1 // loop_pre_header
      _
    $region3: #{tpu_custom_call.1} parent=1 // loop_header
      %s17 = sphi 0, %s21
      %p18 = scmp.ge.s32.totalorder %s17, 4
      %s27 = sphi 0, %s29
      %s30 = sphi 0, %s27
      %s31 = sphi 0, %s30
      %s47 = sphi 0, %s31
      %s51 = sphi 0, %s51
      %s53 = sphi 0, %s51
      %s54 = sphi 0, %s53
      %s68 = sphi 0, %s54
      %s72 = sphi 0, %s72
      %s74 = sphi 0, %s72
      %s75 = sphi 0, %s74
      %s89 = sphi 0, %s75
      %s93 = sphi 0, %s93
      %s95 = sphi 0, %s93
      %s96 = sphi 0, %s95
      %s110 = sphi 0, %s96
      %s116 = sphi 0, %s118
      %s119 = sphi 0, %s116
      %s120 = sphi 0, %s119
      %s136 = sphi 0, %s120
    $region4: #{tpu_custom_call.1} parent=1 // loop_header_branch
      %20 = sbr.rel (%p18) target = $region8
    $region5: #{tpu_custom_call.1} parent=1 // loop_body
      %s22 = ssub.s32 %s17, 1
      %s23 = ssub.s32 %s17, 2
      %s24 = sadd.s32 %s17, 1
      %s25 = ssub.s32 %s17, %s24
      %p26 = scmp.eq.s32.totalorder %s25, 0
      %s28 = sadd.s32 %s27, 1
      %s29 = scalar_select %p26, %s27, %s28
      %p32 = pneg %p26
      %p33 = scmp.eq.s32.totalorder %s17, 1
      %p34 = por %p32, %p33
      %p35 = scmp.ne.s32.totalorder %s27, %s30
      %p36 = scmp.eq.s32.totalorder %s17, 0
      %p37 = por %p35, %p36
      %p38 = scmp.ne.s32.totalorder %s27, %s30
      %p39 = scmp.eq.s32.totalorder %s22, 1
      %p40 = por %p38, %p39
      %p41 = scmp.ne.s32.totalorder %s30, %s31
      %p42 = scmp.eq.s32.totalorder %s22, 0
      %p43 = por %p41, %p42
      %p44 = scmp.ne.s32.totalorder %s30, %s31
      %p45 = scmp.eq.s32.totalorder %s23, 1
      %p46 = por %p44, %p45
      %p48 = scmp.ne.s32.totalorder %s31, %s47
      %p49 = scmp.eq.s32.totalorder %s23, 0
      %p50 = por %p48, %p49
      %s52 = sadd.s32 %s51, 1
      %p55 = scmp.eq.s32.totalorder %s17, 1
      %p56 = scmp.ne.s32.totalorder %s51, %s53
      %p57 = scmp.eq.s32.totalorder %s17, 0
      %p58 = por %p56, %p57
      %p59 = scmp.ne.s32.totalorder %s51, %s53
      %p60 = scmp.eq.s32.totalorder %s22, 1
      %p61 = por %p59, %p60
      %p62 = scmp.ne.s32.totalorder %s53, %s54
      %p63 = scmp.eq.s32.totalorder %s22, 0
      %p64 = por %p62, %p63
      %p65 = scmp.ne.s32.totalorder %s53, %s54
      %p66 = scmp.eq.s32.totalorder %s23, 1
      %p67 = por %p65, %p66
      %p69 = scmp.ne.s32.totalorder %s54, %s68
      %p70 = scmp.eq.s32.totalorder %s23, 0
      %p71 = por %p69, %p70
      %s73 = sadd.s32 %s72, 1
      %p76 = scmp.eq.s32.totalorder %s17, 1
      %p77 = scmp.ne.s32.totalorder %s72, %s74
      %p78 = scmp.eq.s32.totalorder %s17, 0
      %p79 = por %p77, %p78
      %p80 = scmp.ne.s32.totalorder %s72, %s74
      %p81 = scmp.eq.s32.totalorder %s22, 1
      %p82 = por %p80, %p81
      %p83 = scmp.ne.s32.totalorder %s74, %s75
      %p84 = scmp.eq.s32.totalorder %s22, 0
      %p85 = por %p83, %p84
      %p86 = scmp.ne.s32.totalorder %s74, %s75
      %p87 = scmp.eq.s32.totalorder %s23, 1
      %p88 = por %p86, %p87
      %p90 = scmp.ne.s32.totalorder %s75, %s89
      %p91 = scmp.eq.s32.totalorder %s23, 0
      %p92 = por %p90, %p91
      %s94 = sadd.s32 %s93, 1
      %p97 = scmp.eq.s32.totalorder %s17, 1
      %p98 = scmp.ne.s32.totalorder %s93, %s95
      %p99 = scmp.eq.s32.totalorder %s17, 0
      %p100 = por %p98, %p99
      %p101 = scmp.ne.s32.totalorder %s93, %s95
      %p102 = scmp.eq.s32.totalorder %s22, 1
      %p103 = por %p101, %p102
      %p104 = scmp.ne.s32.totalorder %s95, %s96
      %p105 = scmp.eq.s32.totalorder %s22, 0
      %p106 = por %p104, %p105
      %p107 = scmp.ne.s32.totalorder %s95, %s96
      %p108 = scmp.eq.s32.totalorder %s23, 1
      %p109 = por %p107, %p108
      %p111 = scmp.ne.s32.totalorder %s96, %s110
      %p112 = scmp.eq.s32.totalorder %s23, 0
      %p113 = por %p111, %p112
      %s114 = ssub.s32 %s17, %s24
      %p115 = scmp.eq.s32.totalorder %s114, 0
      %s117 = sadd.s32 %s116, 1
      %s118 = scalar_select %p115, %s116, %s117
      %p121 = pneg %p115
      %p122 = scmp.eq.s32.totalorder %s17, 1
      %p123 = por %p121, %p122
      %p124 = scmp.ne.s32.totalorder %s116, %s119
      %p125 = scmp.eq.s32.totalorder %s17, 0
      %p126 = por %p124, %p125
      %p127 = scmp.ne.s32.totalorder %s116, %s119
      %p128 = scmp.eq.s32.totalorder %s22, 1
      %p129 = por %p127, %p128
      %p130 = scmp.ne.s32.totalorder %s119, %s120
      %p131 = scmp.eq.s32.totalorder %s22, 0
      %p132 = por %p130, %p131
      %p133 = scmp.ne.s32.totalorder %s119, %s120
      %p134 = scmp.eq.s32.totalorder %s23, 1
      %p135 = por %p133, %p134
      %p137 = scmp.ne.s32.totalorder %s120, %s136
      %p138 = scmp.eq.s32.totalorder %s23, 0
      %p139 = por %p137, %p138
      %p140 = scmp.le.s32.totalorder 1, %s17
      %p141 = scmp.lt.s32.totalorder %s17, 3
      %p142 = pnand %p140, %p141
      %p143 = pneg %p142
      // Predicated region
      $region9: #{tpu_custom_call.1} parent=5 // pred_check
        _
      $region10: #{tpu_custom_call.1} parent=5 // pred_check_branch
        %145 = sbr.rel (%p142) target = $region12
      $region11: #{tpu_custom_call.1} parent=5 // pred_region
        %s146 = ssub.s32 %s17, 1
        // Predicated region
        $region13: #{tpu_custom_call.1} parent=11 // pred_check
          %p147 = pneg %p64
        $region14: #{tpu_custom_call.1} parent=11 // pred_check_branch
          %149 = sbr.rel (%p147) target = $region16
        $region15: #{tpu_custom_call.1} parent=11 // pred_region
          %s151 = ssub.s32 3072, 3072
          %152 = vsyncadd [#allocation6], %s151
          %s153 = sshll.u32 [#allocation5], 4
          %s154 = int_to_ptr.vmem [resolvable:$true] %s153
          %159 = dma.hbm_to_vmem [thread:$0]  %s1, 3072, %s154, [#allocation6], 64, 64, 4
        $region16: #{tpu_custom_call.1} parent=11 // pred_fallthru
          _
        // Predicated region
        $region17: #{tpu_custom_call.1} parent=11 // pred_check
          %p160 = pneg %p85
        $region18: #{tpu_custom_call.1} parent=11 // pred_check_branch
          %162 = sbr.rel (%p160) target = $region20
        $region19: #{tpu_custom_call.1} parent=11 // pred_region
          _
        $region20: #{tpu_custom_call.1} parent=11 // pred_fallthru
          _
        // Predicated region
        $region21: #{tpu_custom_call.1} parent=11 // pred_check
          %p163 = pneg %p106
        $region22: #{tpu_custom_call.1} parent=11 // pred_check_branch
          %165 = sbr.rel (%p163) target = $region24
        $region23: #{tpu_custom_call.1} parent=11 // pred_region
          _
        $region24: #{tpu_custom_call.1} parent=11 // pred_fallthru
          _
      $region12: #{tpu_custom_call.1} parent=5 // pred_fallthru
        _
      %p166 = scmp.lt.s32.totalorder %s17, 2
      // Predicated region
      $region25: #{tpu_custom_call.1} parent=5 // pred_check
        %p167 = pneg %p166
      $region26: #{tpu_custom_call.1} parent=5 // pred_check_branch
        %169 = sbr.rel (%p167) target = $region28
      $region27: #{tpu_custom_call.1} parent=5 // pred_region
        // Predicated region
        $region29: #{tpu_custom_call.1} parent=27 // pred_check
          %p170 = pneg %p37
        $region30: #{tpu_custom_call.1} parent=27 // pred_check_branch
          %172 = sbr.rel (%p170) target = $region32
        $region31: #{tpu_custom_call.1} parent=27 // pred_region
          %s173 = sand.u32 %s27, 1
          %s174 = scalar_lea.sflag [#allocation3], %s173
          %s175 = sand.u32 %s27, 1
          %s176 = smul.addr %s175, 16
          %s177 = scalar_lea.vmem [#allocation2], %s176
          %s179 = ssub.s32 256, 256
          %180 = vsyncadd %s174, %s179
          %s181 = smul.addr %s17, 4
          %s182 = smul.addr %s181, 64
          %s183 = scalar_lea.hbm %s0, %s182
          %s184 = sshll.u32 %s177, 4
          %s185 = int_to_ptr.vmem [resolvable:$true] %s184
          %190 = dma.hbm_to_vmem [thread:$0]  %s183, 256, %s185, %s174, 64, 64, 4
        $region32: #{tpu_custom_call.1} parent=27 // pred_fallthru
          _
      $region28: #{tpu_custom_call.1} parent=5 // pred_fallthru
        _
      %p191 = scmp.le.s32.totalorder 1, %s17
      %p192 = scmp.lt.s32.totalorder %s17, 3
      %p193 = pnand %p191, %p192
      %p194 = pneg %p193
      // Predicated region
      $region33: #{tpu_custom_call.1} parent=5 // pred_check
        _
      $region34: #{tpu_custom_call.1} parent=5 // pred_check_branch
        %196 = sbr.rel (%p193) target = $region36
      $region35: #{tpu_custom_call.1} parent=5 // pred_region
        %s197 = ssub.s32 %s17, 1
        %s198 = sand.u32 %s30, 1
        %s199 = scalar_lea.sflag [#allocation3], %s198
        %s200 = sand.u32 %s30, 1
        %s201 = smul.addr %s200, 16
        %s202 = scalar_lea.vmem [#allocation2], %s201
        // Predicated region
        $region37: #{tpu_custom_call.1} parent=35 // pred_check
          %p203 = pneg %p43
        $region38: #{tpu_custom_call.1} parent=35 // pred_check_branch
          %205 = sbr.rel (%p203) target = $region40
        $region39: #{tpu_custom_call.1} parent=35 // pred_region
          %206 = dma.done %s199, 256
        $region40: #{tpu_custom_call.1} parent=35 // pred_fallthru
          _
        // Predicated region
        $region41: #{tpu_custom_call.1} parent=35 // pred_check
          %p207 = pneg %p64
        $region42: #{tpu_custom_call.1} parent=35 // pred_check_branch
          %209 = sbr.rel (%p207) target = $region44
        $region43: #{tpu_custom_call.1} parent=35 // pred_region
          %210 = dma.done [#allocation6], 3072
        $region44: #{tpu_custom_call.1} parent=35 // pred_fallthru
          _
        %s211 = sand.u32 %s30, 1
        %s212 = scalar_lea.sflag [#allocation3], %s211
        %s213 = sand.u32 %s30, 1
        %s214 = smul.addr %s213, 16
        %s215 = scalar_lea.vmem [#allocation2], %s214
        %p216 = pneg %p43
        %p217 = pneg %p40
        %p218 = pneg %p64
        %p219 = pneg %p61
        %p220 = pneg %p85
        %p221 = pneg %p82
        %p222 = pneg %p106
        %p223 = pneg %p103
        %p224 = pneg %p132
        %p225 = pneg %p129
        %s226 = sand.u32 %s119, 1
        %s227 = scalar_lea.sflag [#allocation4], %s226
        %s228 = sand.u32 %s119, 1
        %s229 = smul.addr %s228, 16
        %s230 = scalar_lea.vmem [#allocation7], %s229
        %v232 = vld [vmem:[%s202] sm:$0xf]
        %v233 = vld [vmem:[%s202 + $0x4] sm:$0xf]
        %v234 = vld [vmem:[%s202 + $0x8] sm:$0xf]
        %v235 = vld [vmem:[#allocation5] sm:$0xf]
        %v236 = vld [vmem:[#allocation5 + $0x4] sm:$0xf]
        %v237 = vld [vmem:[#allocation5 + $0x8] sm:$0xf]
        %v238 = vld [vmem:[#allocation5 + $0xc] sm:$0xf]
        %v239 = vld [vmem:[#allocation5 + $0x10] sm:$0xf]
        %v240 = vld [vmem:[#allocation5 + $0x14] sm:$0xf]
        %v241 = vld [vmem:[#allocation5 + $0x18] sm:$0xf]
        %v242 = vld [vmem:[#allocation5 + $0x1c] sm:$0xf]
        %v243 = vld [vmem:[#allocation5 + $0x20] sm:$0xf]
        %v244 = vld [vmem:[#allocation5 + $0x24] sm:$0xf]
        %v245 = vld [vmem:[#allocation5 + $0x28] sm:$0xf]
        %v246 = vld [vmem:[#allocation5 + $0x2c] sm:$0xf]
        %v247 = vld [vmem:[#allocation5 + $0x30] sm:$0xf]
        %v248 = vld [vmem:[#allocation5 + $0x34] sm:$0xf]
        %v249 = vld [vmem:[#allocation5 + $0x38] sm:$0xf]
        %v250 = vld [vmem:[#allocation5 + $0x3c] sm:$0xf]
        %s251 = scalar_lea.vmem [#allocation5], 64
        %v252 = vld [vmem:[%s251] sm:$0xf]
        %v253 = vld [vmem:[%s251 + $0x4] sm:$0xf]
        %v254 = vld [vmem:[%s251 + $0x8] sm:$0xf]
        %v255 = vld [vmem:[%s251 + $0xc] sm:$0xf]
        %v256 = vld [vmem:[%s251 + $0x10] sm:$0xf]
        %v257 = vld [vmem:[%s251 + $0x14] sm:$0xf]
        %v258 = vld [vmem:[%s251 + $0x18] sm:$0xf]
        %v259 = vld [vmem:[%s251 + $0x1c] sm:$0xf]
        %v260 = vld [vmem:[%s251 + $0x20] sm:$0xf]
        %v261 = vld [vmem:[%s251 + $0x24] sm:$0xf]
        %v262 = vld [vmem:[%s251 + $0x28] sm:$0xf]
        %v263 = vld [vmem:[%s251 + $0x2c] sm:$0xf]
        %v264 = vld [vmem:[%s251 + $0x30] sm:$0xf]
        %v265 = vld [vmem:[%s251 + $0x34] sm:$0xf]
        %v266 = vld [vmem:[%s251 + $0x38] sm:$0xf]
        %v267 = vld [vmem:[%s251 + $0x3c] sm:$0xf]
        %v271 = vunpack.c.l.b16 %v232
        %v272 = vunpack.c.l.b16 %v233
        %v273 = vunpack.c.l.b16 %v234
        %v274 = vpack.c.b16 %v272, %v271
        %v275 = vpack.c.b16 %v273, %v273
        %vm276 = vsmask.f32 7424
        %v278 = vshrl.u32 %v274, 16
        %v280 = vshll.u32 %v274, 16
        %v282 = vrot.slane %v280, 1
        %v283 = vor.u32 %v278, %v282
        %v285 = vshll.u32 %v275, 16
        %v287 = vrot.slane %v285, 1
        %v288 = vsel %vm276, %v283, %v287
        %v306 = vunpack.c.l.b16 %v252
        %v307 = vunpack.c.l.b16 %v253
        %v308 = vunpack.c.l.b16 %v254
        %v309 = vunpack.c.l.b16 %v255
        %v310 = vunpack.c.l.b16 %v256
        %v311 = vunpack.c.l.b16 %v257
        %v312 = vunpack.c.l.b16 %v258
        %v313 = vunpack.c.l.b16 %v259
        %v314 = vunpack.c.l.b16 %v260
        %v315 = vunpack.c.l.b16 %v261
        %v316 = vunpack.c.l.b16 %v262
        %v317 = vunpack.c.l.b16 %v263
        %v318 = vunpack.c.l.b16 %v264
        %v319 = vunpack.c.l.b16 %v265
        %v320 = vunpack.c.l.b16 %v266
        %v321 = vunpack.c.l.b16 %v267
        %v322 = vpack.c.b16 %v307, %v306
        %v323 = vpack.c.b16 %v309, %v308
        %v324 = vpack.c.b16 %v311, %v310
        %v325 = vpack.c.b16 %v313, %v312
        %v326 = vpack.c.b16 %v315, %v314
        %v327 = vpack.c.b16 %v317, %v316
        %v328 = vpack.c.b16 %v319, %v318
        %v329 = vpack.c.b16 %v321, %v320
        %338 = vmatprep.subr.bf16.mxu0 0
        %339 = vmatpush1.bf16.msra.mxu0 %v322
        %340 = vmatprep.subr.bf16.mxu0 0
        %341 = vmatpush1.bf16.msra.mxu0 %v323
        %342 = vmatprep.subr.bf16.mxu0 0
        %343 = vmatpush1.bf16.msra.mxu0 %v324
        %344 = vmatprep.subr.bf16.mxu0 0
        %345 = vmatpush1.bf16.msra.mxu0 %v325
        %346 = vmatprep.subr.bf16.mxu0 0
        %347 = vmatpush1.bf16.msra.mxu0 %v326
        %348 = vmatprep.subr.bf16.mxu0 0
        %349 = vmatpush1.bf16.msra.mxu0 %v327
        %350 = vmatprep.subr.bf16.mxu0 0
        %351 = vmatpush1.bf16.msra.mxu0 %v328
        %352 = vmatprep.subr.bf16.mxu0 0
        %353 = vmatpush1.bf16.msra.mxu0 %v329
        %354 = vmatprep.subr.bf16.mxu0 0
        %355 = vmatpush1.bf16.msra.mxu0 0
        %356 = vmatprep.subr.bf16.mxu0 0
        %357 = vmatpush1.bf16.msra.mxu0 0
        %358 = vmatprep.subr.bf16.mxu0 0
        %359 = vmatpush1.bf16.msra.mxu0 0
        %360 = vmatprep.subr.bf16.mxu0 0
        %361 = vmatpush1.bf16.msra.mxu0 0
        %362 = vmatprep.subr.bf16.mxu0 0
        %363 = vmatpush1.bf16.msra.mxu0 0
        %364 = vmatprep.subr.bf16.mxu0 0
        %365 = vmatpush1.bf16.msra.mxu0 0
        %366 = vmatprep.subr.bf16.mxu0 0
        %367 = vmatpush1.bf16.msra.mxu0 0
        %368 = vmatprep.subr.bf16.mxu0 0
        %369 = vmatpush1.bf16.msra.mxu0 0
        %370 = vmatprep.mubr.bf16.mxu0 0
        %371 = vmatmul.mubr.bf16.gmra.mrb[0].mxu0 %v288
        %v372 = vpop.f32.mrb[0].mxu0
        %v373 = vadd.f32 0.0, %v372
        %v374 = vpop.f32.mrb[0].mxu0
        %v375 = vpop.f32.mrb[0].mxu0
        %v376 = vadd.f32 0.0, %v375
        %v377 = vpop.f32.mrb[0].mxu0
        %378 = vdwg.mxu0
        %v396 = vunpack.c.l.b16 %v235
        %v397 = vunpack.c.l.b16 %v236
        %v398 = vunpack.c.l.b16 %v237
        %v399 = vunpack.c.l.b16 %v238
        %v400 = vunpack.c.l.b16 %v239
        %v401 = vunpack.c.l.b16 %v240
        %v402 = vunpack.c.l.b16 %v241
        %v403 = vunpack.c.l.b16 %v242
        %v404 = vunpack.c.l.b16 %v243
        %v405 = vunpack.c.l.b16 %v244
        %v406 = vunpack.c.l.b16 %v245
        %v407 = vunpack.c.l.b16 %v246
        %v408 = vunpack.c.l.b16 %v247
        %v409 = vunpack.c.l.b16 %v248
        %v410 = vunpack.c.l.b16 %v249
        %v411 = vunpack.c.l.b16 %v250
        %v412 = vpack.c.b16 %v397, %v396
        %v413 = vpack.c.b16 %v399, %v398
        %v414 = vpack.c.b16 %v401, %v400
        %v415 = vpack.c.b16 %v403, %v402
        %v416 = vpack.c.b16 %v405, %v404
        %v417 = vpack.c.b16 %v407, %v406
        %v418 = vpack.c.b16 %v409, %v408
        %v419 = vpack.c.b16 %v411, %v410
        %428 = vmatprep.subr.bf16.mxu0 0
        %429 = vmatpush1.bf16.msra.mxu0 %v412
        %430 = vmatprep.subr.bf16.mxu0 0
        %431 = vmatpush1.bf16.msra.mxu0 %v413
        %432 = vmatprep.subr.bf16.mxu0 0
        %433 = vmatpush1.bf16.msra.mxu0 %v414
        %434 = vmatprep.subr.bf16.mxu0 0
        %435 = vmatpush1.bf16.msra.mxu0 %v415
        %436 = vmatprep.subr.bf16.mxu0 0
        %437 = vmatpush1.bf16.msra.mxu0 %v416
        %438 = vmatprep.subr.bf16.mxu0 0
        %439 = vmatpush1.bf16.msra.mxu0 %v417
        %440 = vmatprep.subr.bf16.mxu0 0
        %441 = vmatpush1.bf16.msra.mxu0 %v418
        %442 = vmatprep.subr.bf16.mxu0 0
        %443 = vmatpush1.bf16.msra.mxu0 %v419
        %444 = vmatprep.subr.bf16.mxu0 0
        %445 = vmatpush1.bf16.msra.mxu0 0
        %446 = vmatprep.subr.bf16.mxu0 0
        %447 = vmatpush1.bf16.msra.mxu0 0
        %448 = vmatprep.subr.bf16.mxu0 0
        %449 = vmatpush1.bf16.msra.mxu0 0
        %450 = vmatprep.subr.bf16.mxu0 0
        %451 = vmatpush1.bf16.msra.mxu0 0
        %452 = vmatprep.subr.bf16.mxu0 0
        %453 = vmatpush1.bf16.msra.mxu0 0
        %454 = vmatprep.subr.bf16.mxu0 0
        %455 = vmatpush1.bf16.msra.mxu0 0
        %456 = vmatprep.subr.bf16.mxu0 0
        %457 = vmatpush1.bf16.msra.mxu0 0
        %458 = vmatprep.subr.bf16.mxu0 0
        %459 = vmatpush1.bf16.msra.mxu0 0
        %460 = vmatprep.mubr.bf16.mxu0 0
        %461 = vmatmul.mubr.bf16.gmra.mrb[0].mxu0 %v274
        %v462 = vpop.f32.mrb[0].mxu0
        %v463 = vadd.f32 %v373, %v462
        %v464 = vpop.f32.mrb[0].mxu0
        %v465 = vpop.f32.mrb[0].mxu0
        %v466 = vadd.f32 %v376, %v465
        %v467 = vpop.f32.mrb[0].mxu0
        %468 = vdwg.mxu0
        %s469 = scalar_lea.vmem [#allocation5], 128
        %v470 = vld [vmem:[%s469] sm:$0xf]
        %v471 = vld [vmem:[%s469 + $0x4] sm:$0xf]
        %v472 = vld [vmem:[%s469 + $0x8] sm:$0xf]
        %v473 = vld [vmem:[%s469 + $0xc] sm:$0xf]
        %v474 = vld [vmem:[%s469 + $0x10] sm:$0xf]
        %v475 = vld [vmem:[%s469 + $0x14] sm:$0xf]
        %v476 = vld [vmem:[%s469 + $0x18] sm:$0xf]
        %v477 = vld [vmem:[%s469 + $0x1c] sm:$0xf]
        %v478 = vld [vmem:[%s469 + $0x20] sm:$0xf]
        %v479 = vld [vmem:[%s469 + $0x24] sm:$0xf]
        %v480 = vld [vmem:[%s469 + $0x28] sm:$0xf]
        %v481 = vld [vmem:[%s469 + $0x2c] sm:$0xf]
        %v482 = vld [vmem:[%s469 + $0x30] sm:$0xf]
        %v483 = vld [vmem:[%s469 + $0x34] sm:$0xf]
        %v484 = vld [vmem:[%s469 + $0x38] sm:$0xf]
        %v485 = vld [vmem:[%s469 + $0x3c] sm:$0xf]
        %vm486 = vcmask 1046528
        %v487 = vrot.slane %v274, 1
        %v488 = vrot.slane %v275, 1
        %v489 = vsel %vm486, %v487, %v488
        %v507 = vunpack.c.l.b16 %v470
        %v508 = vunpack.c.l.b16 %v471
        %v509 = vunpack.c.l.b16 %v472
        %v510 = vunpack.c.l.b16 %v473
        %v511 = vunpack.c.l.b16 %v474
        %v512 = vunpack.c.l.b16 %v475
        %v513 = vunpack.c.l.b16 %v476
        %v514 = vunpack.c.l.b16 %v477
        %v515 = vunpack.c.l.b16 %v478
        %v516 = vunpack.c.l.b16 %v479
        %v517 = vunpack.c.l.b16 %v480
        %v518 = vunpack.c.l.b16 %v481
        %v519 = vunpack.c.l.b16 %v482
        %v520 = vunpack.c.l.b16 %v483
        %v521 = vunpack.c.l.b16 %v484
        %v522 = vunpack.c.l.b16 %v485
        %v523 = vpack.c.b16 %v508, %v507
        %v524 = vpack.c.b16 %v510, %v509
        %v525 = vpack.c.b16 %v512, %v511
        %v526 = vpack.c.b16 %v514, %v513
        %v527 = vpack.c.b16 %v516, %v515
        %v528 = vpack.c.b16 %v518, %v517
        %v529 = vpack.c.b16 %v520, %v519
        %v530 = vpack.c.b16 %v522, %v521
        %539 = vmatprep.subr.bf16.mxu0 0
        %540 = vmatpush1.bf16.msra.mxu0 %v523
        %541 = vmatprep.subr.bf16.mxu0 0
        %542 = vmatpush1.bf16.msra.mxu0 %v524
        %543 = vmatprep.subr.bf16.mxu0 0
        %544 = vmatpush1.bf16.msra.mxu0 %v525
        %545 = vmatprep.subr.bf16.mxu0 0
        %546 = vmatpush1.bf16.msra.mxu0 %v526
        %547 = vmatprep.subr.bf16.mxu0 0
        %548 = vmatpush1.bf16.msra.mxu0 %v527
        %549 = vmatprep.subr.bf16.mxu0 0
        %550 = vmatpush1.bf16.msra.mxu0 %v528
        %551 = vmatprep.subr.bf16.mxu0 0
        %552 = vmatpush1.bf16.msra.mxu0 %v529
        %553 = vmatprep.subr.bf16.mxu0 0
        %554 = vmatpush1.bf16.msra.mxu0 %v530
        %555 = vmatprep.subr.bf16.mxu0 0
        %556 = vmatpush1.bf16.msra.mxu0 0
        %557 = vmatprep.subr.bf16.mxu0 0
        %558 = vmatpush1.bf16.msra.mxu0 0
        %559 = vmatprep.subr.bf16.mxu0 0
        %560 = vmatpush1.bf16.msra.mxu0 0
        %561 = vmatprep.subr.bf16.mxu0 0
        %562 = vmatpush1.bf16.msra.mxu0 0
        %563 = vmatprep.subr.bf16.mxu0 0
        %564 = vmatpush1.bf16.msra.mxu0 0
        %565 = vmatprep.subr.bf16.mxu0 0
        %566 = vmatpush1.bf16.msra.mxu0 0
        %567 = vmatprep.subr.bf16.mxu0 0
        %568 = vmatpush1.bf16.msra.mxu0 0
        %569 = vmatprep.subr.bf16.mxu0 0
        %570 = vmatpush1.bf16.msra.mxu0 0
        %571 = vmatprep.mubr.bf16.mxu0 0
        %572 = vmatmul.mubr.bf16.gmra.mrb[0].mxu0 %v489
        %v573 = vpop.f32.mrb[0].mxu0
        %v574 = vadd.f32 0.0, %v573
        %v575 = vpop.f32.mrb[0].mxu0
        %v576 = vpop.f32.mrb[0].mxu0
        %v577 = vadd.f32 0.0, %v576
        %v578 = vpop.f32.mrb[0].mxu0
        %579 = vdwg.mxu0
        %v580 = vadd.f32 %v463, %v574
        %v581 = vadd.f32 %v466, %v577
        %v582 = vld [vmem:[%s2] sm:$0x1]
        %v584 = vlaneseq
        %v585 = vshrl.u32 %v584, 7
        %v586 = vsub.s32 0, %v585
        %v587 = vrot.slane %v582, %v586
        %v589 = vmul.f32 %v580, %v587
        %v590 = vmul.f32 %v581, %v587
        %v591 = vld [vmem:[%s3] sm:$0x1]
        %v593 = vlaneseq
        %v594 = vshrl.u32 %v593, 7
        %v595 = vsub.s32 0, %v594
        %v596 = vrot.slane %v591, %v595
        %v598 = vadd.f32 %v589, %v596
        %v599 = vadd.f32 %v590, %v596
        %600 = vst [vmem:[%s230] sm:$0xff] %v598
        %601 = vst [vmem:[%s230 + $0x8] sm:$0xff] %v599
        %s602 = sand.u32 %s119, 1
        %s603 = scalar_lea.sflag [#allocation4], %s602
        %s604 = sand.u32 %s119, 1
        %s605 = smul.addr %s604, 16
        %s606 = scalar_lea.vmem [#allocation7], %s605
        // Predicated region
        $region45: #{tpu_custom_call.1} parent=35 // pred_check
          %p607 = pneg %p129
        $region46: #{tpu_custom_call.1} parent=35 // pred_check_branch
          %609 = sbr.rel (%p607) target = $region48
        $region47: #{tpu_custom_call.1} parent=35 // pred_region
          %s611 = ssub.s32 256, 256
          %612 = vsyncadd %s603, %s611
          %s613 = smul.addr %s22, 2
          %s614 = smul.addr %s613, 128
          %s615 = scalar_lea.hbm %s4, %s614
          %s616 = sshll.u32 %s606, 4
          %s617 = int_to_ptr.vmem [resolvable:$true] %s616
          %622 = dma.vmem_to_hbm [thread:$0]  %s617, 256, %s615, %s603, 128, 128, 8
        $region48: #{tpu_custom_call.1} parent=35 // pred_fallthru
          _
      $region36: #{tpu_custom_call.1} parent=5 // pred_fallthru
        _
      %p623 = scmp.le.s32.totalorder 2, %s17
      // Predicated region
      $region49: #{tpu_custom_call.1} parent=5 // pred_check
        %p624 = pneg %p623
      $region50: #{tpu_custom_call.1} parent=5 // pred_check_branch
        %626 = sbr.rel (%p624) target = $region52
      $region51: #{tpu_custom_call.1} parent=5 // pred_region
        %s627 = ssub.s32 %s17, 2
        // Predicated region
        $region53: #{tpu_custom_call.1} parent=51 // pred_check
          %p628 = pneg %p135
        $region54: #{tpu_custom_call.1} parent=51 // pred_check_branch
          %630 = sbr.rel (%p628) target = $region56
        $region55: #{tpu_custom_call.1} parent=51 // pred_region
          %s631 = sand.u32 %s120, 1
          %s632 = scalar_lea.sflag [#allocation4], %s631
          %s633 = sand.u32 %s120, 1
          %s634 = smul.addr %s633, 16
          %s635 = scalar_lea.vmem [#allocation7], %s634
          %636 = dma.done %s632, 256
        $region56: #{tpu_custom_call.1} parent=51 // pred_fallthru
          _
      $region52: #{tpu_custom_call.1} parent=5 // pred_fallthru
        _
    $region6: #{tpu_custom_call.1} parent=1 // loop_footer
      %s21 = sadd.s32 1, %s17
    $region7: #{tpu_custom_call.1} parent=1 // loop_footer_branch
      %16 = sbr.rel target = $region3
    $region8: #{tpu_custom_call.1} parent=1 // loop_exit
      _
    %637 = vsyncpa [#allocation3], 1
    %s638 = scalar_lea.sflag [#allocation3], 1
    %639 = vsyncpa %s638, 1
    %640 = vsyncpa [#allocation6], 1
    %641 = vsyncpa [#allocation4], 1
    %s642 = scalar_lea.sflag [#allocation4], 1
    %643 = vsyncpa %s642, 1

</llo_original>
